<compile_context>
chip_gen: v5e
topology: v5e:2x2
jax: 0.10.0
libtpu: 0.0.40
codegen_flags: <defaults>
</compile_context>

<pallas_src>
import functools

import jax
import jax.numpy as jnp
from jax import lax
from jax.experimental import pallas as pl
from jax.experimental.pallas import tpu as pltpu


def _opl_kernel(feat_ref, lab_col_ref, lab_row_ref, out_ref, acc_ref,
                *, scale_pos, scale_neg, thresh, mxu_dtype):
    k = pl.program_id(0)

    @pl.when(k == 0)
    def _init():
        acc_ref[...] = jnp.zeros_like(acc_ref)

    # ---- Gram accumulation on the MXU (contraction over D, no transpose) ----
    x = feat_ref[...]                                   # (B, tile_D), native dtype
    if mxu_dtype is not None and x.dtype != jnp.dtype(mxu_dtype):
        x = x.astype(mxu_dtype)                         # opt-in bf16 MXU feed
    acc_ref[...] += lax.dot_general(
        x, x, dimension_numbers=(((1,), (1,)), ((), ())),
        preferred_element_type=jnp.float32)

    @pl.when(k == pl.num_programs(0) - 1)
    def _epilogue():
        g = acc_ref[...]                                # (B, B) f32
        B = g.shape[0]

        # ---- masks (kept boolean, never materialized as f32) ----------------
        same = lab_col_ref[...] == lab_row_ref[...]     # (B,1)==(1,B) -> (B,B)
        rid = lax.broadcasted_iota(jnp.int32, (B, B), 0)
        cid = lax.broadcasted_iota(jnp.int32, (B, B), 1)
        eye = rid == cid
        pos_mask = same & jnp.logical_not(eye)

        # ---- normalize via the Gram diagonal (no (B,D) divide, no transpose):
        gd = jnp.where(eye, g, 0.0)
        inv_col = lax.rsqrt(
            jnp.maximum(jnp.sum(gd, axis=1, keepdims=True), 1e-24))  # (B,1)
        inv_row = lax.rsqrt(
            jnp.maximum(jnp.sum(gd, axis=0, keepdims=True), 1e-24))  # (1,B)
        sim = g * inv_col * inv_row

        # ---- fused reductions: mask the exp *arguments* (fill -> exp == 0),
        # sublane partials over each B^2 term stacked into (5, B), then one
        # cross-lane reduce.
        fill = jnp.float32(-1e9)
        p_pos = jnp.sum(jnp.where(pos_mask, sim, 0.0),
                        axis=0, keepdims=True)
        p_neg = jnp.sum(jnp.where(same, 0.0, jnp.abs(sim)),
                        axis=0, keepdims=True)
        p_dp = jnp.sum(jnp.exp(jnp.where(pos_mask,
                                         -scale_pos * (sim - thresh), fill)),
                       axis=0, keepdims=True)
        p_dn = jnp.sum(jnp.exp(jnp.where(same, fill,
                                         scale_neg * (sim - thresh))),
                       axis=0, keepdims=True)
        # NOTE: f32 boolean-count is exact only for B < 4096 (B^2 < 2^24).
        p_sm = jnp.sum(same.astype(jnp.float32), axis=0, keepdims=True)
        partials = jnp.concatenate([p_pos, p_neg, p_dp, p_dn, p_sm], axis=0)
        tot = jnp.sum(partials, axis=1, keepdims=True)  # (5, 1)

        sum_pos = tot[0:1, :]
        sum_neg = tot[1:2, :]
        dyn_pos = tot[2:3, :]
        dyn_neg = tot[3:4, :]
        n_same = tot[4:5, :]

        # analytic pair counts: same-label pairs minus diagonal / complement.
        count_pos = n_same - jnp.float32(B)
        count_neg = jnp.float32(B * B) - n_same

        pos_pairs_mean = sum_pos / (count_pos + 1e-6)
        neg_pairs_mean = sum_neg / (count_neg + 1e-6)
        weighted_pos_loss = (1.0 / scale_pos) * jnp.log(1.0 + dyn_pos)
        weighted_neg_loss = (1.0 / scale_neg) * jnp.log(1.0 + dyn_neg)
        ortho_loss = 2.0 - pos_pairs_mean + 0.3 * neg_pairs_mean
        total_loss = weighted_pos_loss + weighted_neg_loss + ortho_loss

        # ---- single unmasked (3, 128) store: rows = [total, pos, neg] -------
        rid3 = lax.broadcasted_iota(jnp.int32, (3, 128), 0)
        out_ref[...] = jnp.where(rid3 == 0, total_loss,
                                 jnp.where(rid3 == 1, pos_pairs_mean,
                                           neg_pairs_mean))


def _round_up(x, m):
    return -(-x // m) * m


def _scoped_vmem_budget_bytes():
    """Per-generation scoped-VMEM budget (leaves headroom on v7x's 64 MiB)."""
    cap = None
    try:
        cap = getattr(pltpu.get_tpu_info(), "vmem_capacity_bytes", None)
    except Exception:
        cap = None
    if not cap:
        cap = 64 * 1024 * 1024                          # conservative fallback
    if cap >= 128 * 1024 * 1024:                        # v5e / v6e
        return 112 * 1024 * 1024
    return max(cap - 16 * 1024 * 1024, 32 * 1024 * 1024)  # v7x: ~48 MiB


def enhanced_orthogonal_projection_loss(features, labels, *,
                                         scale_pos=2.0, scale_neg=50.0,
                                         thresh=0.8, margin=0.2,
                                         mxu_dtype=None, tile_d=None):
    # NOTE: `margin` is unused in the PyTorch forward as well.
    del margin
    B, D = features.shape
    lab_col = labels.reshape(B, 1).astype(jnp.int32)
    lab_row = labels.reshape(1, B).astype(jnp.int32)

    itemsize = jnp.dtype(features.dtype).itemsize
    budget = _scoped_vmem_budget_bytes()

    # ---- VMEM accounting (bytes) --------------------------------------------
    b_sub_feat = _round_up(B, max(8, 32 // itemsize))   # sublane pack, input dtype
    b_sub = _round_up(B, 8)                             # f32 sublane pad
    b_lane = max(_round_up(B, 128), 128)                # lane pad
    # Gram accumulator + ~5 live (B,B) f32 epilogue temporaries + misc slack.
    fixed_bytes = 6 * b_sub * b_lane * 4 + (2 << 20)

    # ---- D tile: largest lane-aligned tile the budget allows ----------------
    if tile_d is None:
        avail = max(budget - fixed_bytes, 2 * b_sub_feat * 128 * itemsize)
        tile_d = (avail // (2 * b_sub_feat * itemsize)) // 128 * 128
        tile_d = int(min(max(tile_d, 128), 1 << 16))
    else:
        assert tile_d >= D or tile_d % 128 == 0, "tile_d must be lane-aligned"

    if D <= tile_d:
        td, feats, n_k = D, features, 1
    else:
        # Balanced lane-aligned tiles; zero-pad D (zero columns contribute
        # nothing to the Gram matrix, so semantics are unchanged).
        d128 = _round_up(D, 128)
        n_k = -(-d128 // tile_d)
        td = _round_up(-(-D // n_k), 128)
        pad = td * n_k - D
        feats = jnp.pad(features, ((0, 0), (0, pad))) if pad else features

    kernel = functools.partial(_opl_kernel,
                               scale_pos=float(scale_pos),
                               scale_neg=float(scale_neg),
                               thresh=float(thresh),
                               mxu_dtype=mxu_dtype)

    vmem_limit = int(min(budget,
                         fixed_bytes + 2 * b_sub_feat * td * itemsize + (4 << 20)))

    out = pl.pallas_call(
        kernel,
        out_shape=jax.ShapeDtypeStruct((3, 128), jnp.float32),
        grid_spec=pltpu.PrefetchScalarGridSpec(
            num_scalar_prefetch=0,
            grid=(n_k,),
            in_specs=[
                pl.BlockSpec((B, td), lambda k: (0, k)),   # feature tile (streamed)
                pl.BlockSpec((B, 1), lambda k: (0, 0)),    # labels as column
                pl.BlockSpec((1, B), lambda k: (0, 0)),    # labels as row
            ],
            out_specs=pl.BlockSpec((3, 128), lambda k: (0, 0)),
            scratch_shapes=[pltpu.VMEM((B, B), jnp.float32)],
        ),
        compiler_params=pltpu.CompilerParams(
            dimension_semantics=("arbitrary",),
            vmem_limit_bytes=vmem_limit),
    )(feats, lab_col, lab_row)

    return out[0, 0], out[1, 0], out[2, 0]


def _reference(features, labels, scale_pos=2.0, scale_neg=50.0, thresh=0.8):
    f = features / jnp.maximum(
        jnp.linalg.norm(features, axis=1, keepdims=True), 1e-12)
    lab = labels[:, None]
    mask = (lab == lab.T)
    eye = jnp.eye(mask.shape[0], dtype=bool)
    mask_pos = jnp.where(mask & ~eye, 1.0, 0.0)
    mask_neg = jnp.where(~mask, 1.0, 0.0)
    sim = f @ f.T
    pos_mean = jnp.sum(mask_pos * sim) / (jnp.sum(mask_pos) + 1e-6)
    neg_mean = jnp.sum(jnp.abs(mask_neg * sim)) / (jnp.sum(mask_neg) + 1e-6)
    dyn_pos = jnp.sum(jnp.where(mask_pos > 0,
                                jnp.exp(-scale_pos * (sim - thresh)), 0.0))
    dyn_neg = jnp.sum(jnp.where(mask_neg > 0,
                                jnp.exp(scale_neg * (sim - thresh)), 0.0))
    wpos = (1.0 / scale_pos) * jnp.log(1.0 + dyn_pos)
    wneg = (1.0 / scale_neg) * jnp.log(1.0 + dyn_neg)
    ortho = 2.0 - pos_mean + 0.3 * neg_mean
    return wpos + wneg + ortho, pos_mean, neg_mean


if __name__ == "__main__":
    key = jax.random.PRNGKey(0)
    kf, kl = jax.random.split(key)

    B, D = 8, 32
    features = jax.random.normal(kf, (B, D), dtype=jnp.float32)
    labels = jax.random.randint(kl, (B,), 0, 3, dtype=jnp.int32)

    total, pos_mean, neg_mean = enhanced_orthogonal_projection_loss(
        features, labels)
    jax.block_until_ready((total, pos_mean, neg_mean))

    ref_total, ref_pos, ref_neg = _reference(features, labels)
    assert jnp.allclose(total, ref_total, rtol=1e-4, atol=1e-4), (total, ref_total)
    assert jnp.allclose(pos_mean, ref_pos, rtol=1e-4, atol=1e-4), (pos_mean, ref_pos)
    assert jnp.allclose(neg_mean, ref_neg, rtol=1e-4, atol=1e-4), (neg_mean, ref_neg)

    print("KERNEL_OK")
</pallas_src>

<mosaic_0001>
module attributes {stable_mosaic.version = 11 : i64} {
  func.func @_opl_kernel(%arg0: i32, %arg1: memref<8x32xf32, #tpu.memory_space<vmem>>, %arg2: memref<8x1xi32, #tpu.memory_space<vmem>>, %arg3: memref<1x8xi32, #tpu.memory_space<vmem>>, %arg4: memref<3x128xf32, #tpu.memory_space<vmem>>, %arg5: memref<8x8xf32, #tpu.memory_space<vmem>>) attributes {dimension_semantics = [#tpu.dimension_semantics<arbitrary>], iteration_bounds = array<i64: 1>, scalar_prefetch = 0 : i64, scratch_operands = 1 : i64, tpu.core_type = #tpu.core_type<tc>, window_params = [{transform_indices = @transform_0, window_bounds = array<i64: 8, 32>}, {pipeline_mode = #tpu.pipeline_mode<synchronous>, transform_indices = @transform_1, window_bounds = array<i64: 8, 1>}, {pipeline_mode = #tpu.pipeline_mode<synchronous>, transform_indices = @transform_2, window_bounds = array<i64: 1, 8>}, {pipeline_mode = #tpu.pipeline_mode<synchronous>, transform_indices = @transform_3, window_bounds = array<i64: 3, 128>}]} {
    %c0_i32 = arith.constant 0 : i32
    %0 = arith.cmpi eq, %arg0, %c0_i32 : i32
    %1 = arith.extui %0 : i1 to i32
    %c0_i32_0 = arith.constant 0 : i32
    %2 = arith.cmpi ne, %1, %c0_i32_0 : i32
    scf.if %2 {
      %cst_8 = arith.constant 0.000000e+00 : f32
      %11 = vector.broadcast %cst_8 : f32 to vector<8x8xf32>
      %c0_9 = arith.constant 0 : index
      %c0_10 = arith.constant 0 : index
      %12 = vector.load %arg5[%c0_9, %c0_10] : memref<8x8xf32, #tpu.memory_space<vmem>>, vector<8x8xf32>
      tpu.vector_store %arg5[%c0_9, %c0_10], %11 {strides = array<i32>} : memref<8x8xf32, #tpu.memory_space<vmem>>, vector<8x8xf32>,
    } else {
    }
    %c0 = arith.constant 0 : index
    %c0_1 = arith.constant 0 : index
    %3 = vector.load %arg1[%c0, %c0_1] : memref<8x32xf32, #tpu.memory_space<vmem>>, vector<8x32xf32>
    %c0_2 = arith.constant 0 : index
    %c0_3 = arith.constant 0 : index
    %4 = vector.load %arg5[%c0_2, %c0_3] : memref<8x8xf32, #tpu.memory_space<vmem>>, vector<8x8xf32>
    %cst = arith.constant dense<0.000000e+00> : vector<8x8xf32>
    %5 = tpu.matmul %3, %3, %cst {dimension_numbers = #tpu.dot_dimension_numbers<[1], [1], [0], [0], [0, 0, 1, 0], [], []>} : vector<8x32xf32>, vector<8x32xf32>, vector<8x8xf32> -> vector<8x8xf32>
    %6 = arith.addf %4, %5 : vector<8x8xf32>
    %c0_4 = arith.constant 0 : index
    %c0_5 = arith.constant 0 : index
    %7 = vector.load %arg5[%c0_4, %c0_5] : memref<8x8xf32, #tpu.memory_space<vmem>>, vector<8x8xf32>
    tpu.vector_store %arg5[%c0_4, %c0_5], %6 {strides = array<i32>} : memref<8x8xf32, #tpu.memory_space<vmem>>, vector<8x8xf32>,
    %c0_i32_6 = arith.constant 0 : i32
    %8 = arith.cmpi eq, %arg0, %c0_i32_6 : i32
    %9 = arith.extui %8 : i1 to i32
    %c0_i32_7 = arith.constant 0 : i32
    %10 = arith.cmpi ne, %9, %c0_i32_7 : i32
    scf.if %10 {
      %c0_8 = arith.constant 0 : index
      %c0_9 = arith.constant 0 : index
      %11 = vector.load %arg5[%c0_8, %c0_9] : memref<8x8xf32, #tpu.memory_space<vmem>>, vector<8x8xf32>
      %c0_10 = arith.constant 0 : index
      %c0_11 = arith.constant 0 : index
      %12 = vector.load %arg2[%c0_10, %c0_11] : memref<8x1xi32, #tpu.memory_space<vmem>>, vector<8x1xi32>
      %c0_12 = arith.constant 0 : index
      %c0_13 = arith.constant 0 : index
      %13 = vector.load %arg3[%c0_12, %c0_13] : memref<1x8xi32, #tpu.memory_space<vmem>>, vector<1x8xi32>
      %14 = vector.broadcast %12 : vector<8x1xi32> to vector<8x8xi32>
      %15 = vector.broadcast %13 : vector<1x8xi32> to vector<8x8xi32>
      %16 = arith.cmpi eq, %14, %15 : vector<8x8xi32>
      %17 = tpu.iota {dimensions = array<i32: 0>} : vector<8x8xi32>
      %18 = tpu.iota {dimensions = array<i32: 1>} : vector<8x8xi32>
      %19 = arith.cmpi eq, %17, %18 : vector<8x8xi32>
      %cst_14 = arith.constant dense<true> : vector<8x8xi1>
      %20 = arith.xori %19, %cst_14 : vector<8x8xi1>
      %21 = arith.andi %16, %20 : vector<8x8xi1>
      %cst_15 = arith.constant 0.000000e+00 : f32
      %22 = vector.broadcast %cst_15 : f32 to vector<8x8xf32>
      %23 = arith.select %19, %11, %22 : vector<8x8xi1>, vector<8x8xf32>
      %cst_16 = arith.constant dense<0.000000e+00> : vector<8xf32>
      %24 = vector.multi_reduction <add>, %23, %cst_16 [1] : vector<8x8xf32> to vector<8xf32>
      %25 = vector.shape_cast %24 : vector<8xf32> to vector<8x1xf32>
      %cst_17 = arith.constant 1.000000e-24 : f32
      %26 = vector.broadcast %cst_17 : f32 to vector<8x1xf32>
      %27 = arith.maximumf %25, %26 : vector<8x1xf32>
      %28 = math.rsqrt %27 : vector<8x1xf32>
      %cst_18 = arith.constant dense<0.000000e+00> : vector<8xf32>
      %29 = vector.multi_reduction <add>, %23, %cst_18 [0] : vector<8x8xf32> to vector<8xf32>
      %30 = vector.shape_cast %29 : vector<8xf32> to vector<1x8xf32>
      %cst_19 = arith.constant 1.000000e-24 : f32
      %31 = vector.broadcast %cst_19 : f32 to vector<1x8xf32>
      %32 = arith.maximumf %30, %31 : vector<1x8xf32>
      %33 = math.rsqrt %32 : vector<1x8xf32>
      %34 = vector.broadcast %28 : vector<8x1xf32> to vector<8x8xf32>
      %35 = arith.mulf %11, %34 : vector<8x8xf32>
      %36 = vector.broadcast %33 : vector<1x8xf32> to vector<8x8xf32>
      %37 = arith.mulf %35, %36 : vector<8x8xf32>
      %cst_20 = arith.constant 0.000000e+00 : f32
      %38 = vector.broadcast %cst_20 : f32 to vector<8x8xf32>
      %39 = arith.select %21, %37, %38 : vector<8x8xi1>, vector<8x8xf32>
      %cst_21 = arith.constant dense<0.000000e+00> : vector<8xf32>
      %40 = vector.multi_reduction <add>, %39, %cst_21 [0] : vector<8x8xf32> to vector<8xf32>
      %41 = vector.shape_cast %40 : vector<8xf32> to vector<1x8xf32>
      %42 = math.absf %37 : vector<8x8xf32>
      %cst_22 = arith.constant 0.000000e+00 : f32
      %43 = vector.broadcast %cst_22 : f32 to vector<8x8xf32>
      %44 = arith.select %16, %43, %42 : vector<8x8xi1>, vector<8x8xf32>
      %cst_23 = arith.constant dense<0.000000e+00> : vector<8xf32>
      %45 = vector.multi_reduction <add>, %44, %cst_23 [0] : vector<8x8xf32> to vector<8xf32>
      %46 = vector.shape_cast %45 : vector<8xf32> to vector<1x8xf32>
      %cst_24 = arith.constant 8.000000e-01 : f32
      %47 = vector.broadcast %cst_24 : f32 to vector<8x8xf32>
      %48 = arith.subf %37, %47 : vector<8x8xf32>
      %cst_25 = arith.constant -2.000000e+00 : f32
      %49 = vector.broadcast %cst_25 : f32 to vector<8x8xf32>
      %50 = arith.mulf %49, %48 : vector<8x8xf32>
      %cst_26 = arith.constant -1.000000e+09 : f32
      %51 = vector.broadcast %cst_26 : f32 to vector<8x8xf32>
      %52 = arith.select %21, %50, %51 : vector<8x8xi1>, vector<8x8xf32>
      %53 = math.exp %52 : vector<8x8xf32>
      %cst_27 = arith.constant dense<0.000000e+00> : vector<8xf32>
      %54 = vector.multi_reduction <add>, %53, %cst_27 [0] : vector<8x8xf32> to vector<8xf32>
      %55 = vector.shape_cast %54 : vector<8xf32> to vector<1x8xf32>
      %cst_28 = arith.constant 8.000000e-01 : f32
      %56 = vector.broadcast %cst_28 : f32 to vector<8x8xf32>
      %57 = arith.subf %37, %56 : vector<8x8xf32>
      %cst_29 = arith.constant 5.000000e+01 : f32
      %58 = vector.broadcast %cst_29 : f32 to vector<8x8xf32>
      %59 = arith.mulf %58, %57 : vector<8x8xf32>
      %cst_30 = arith.constant -1.000000e+09 : f32
      %60 = vector.broadcast %cst_30 : f32 to vector<8x8xf32>
      %61 = arith.select %16, %60, %59 : vector<8x8xi1>, vector<8x8xf32>
      %62 = math.exp %61 : vector<8x8xf32>
      %cst_31 = arith.constant dense<0.000000e+00> : vector<8xf32>
      %63 = vector.multi_reduction <add>, %62, %cst_31 [0] : vector<8x8xf32> to vector<8xf32>
      %64 = vector.shape_cast %63 : vector<8xf32> to vector<1x8xf32>
      %65 = arith.extui %16 : vector<8x8xi1> to vector<8x8xi32>
      %66 = arith.sitofp %65 : vector<8x8xi32> to vector<8x8xf32>
      %cst_32 = arith.constant dense<0.000000e+00> : vector<8xf32>
      %67 = vector.multi_reduction <add>, %66, %cst_32 [0] : vector<8x8xf32> to vector<8xf32>
      %68 = vector.shape_cast %67 : vector<8xf32> to vector<1x8xf32>
      %69 = tpu.concatenate %41, %46, %55, %64, %68 in 0 : vector<1x8xf32>, vector<1x8xf32>, vector<1x8xf32>, vector<1x8xf32>, vector<1x8xf32> -> vector<5x8xf32>
      %cst_33 = arith.constant dense<0.000000e+00> : vector<5xf32>
      %70 = vector.multi_reduction <add>, %69, %cst_33 [1] : vector<5x8xf32> to vector<5xf32>
      %71 = vector.shape_cast %70 : vector<5xf32> to vector<5x1xf32>
      %72 = vector.extract_strided_slice %71 {offsets = [0, 0], sizes = [1, 1], strides = [1, 1]} : vector<5x1xf32> to vector<1x1xf32>
      %73 = vector.extract_strided_slice %71 {offsets = [1, 0], sizes = [1, 1], strides = [1, 1]} : vector<5x1xf32> to vector<1x1xf32>
      %74 = vector.extract_strided_slice %71 {offsets = [2, 0], sizes = [1, 1], strides = [1, 1]} : vector<5x1xf32> to vector<1x1xf32>
      %75 = vector.extract_strided_slice %71 {offsets = [3, 0], sizes = [1, 1], strides = [1, 1]} : vector<5x1xf32> to vector<1x1xf32>
      %76 = vector.extract_strided_slice %71 {offsets = [4, 0], sizes = [1, 1], strides = [1, 1]} : vector<5x1xf32> to vector<1x1xf32>
      %cst_34 = arith.constant 8.000000e+00 : f32
      %77 = vector.broadcast %cst_34 : f32 to vector<1x1xf32>
      %78 = arith.subf %76, %77 : vector<1x1xf32>
      %cst_35 = arith.constant 6.400000e+01 : f32
      %79 = vector.broadcast %cst_35 : f32 to vector<1x1xf32>
      %80 = arith.subf %79, %76 : vector<1x1xf32>
      %cst_36 = arith.constant 9.99999997E-7 : f32
      %81 = vector.broadcast %cst_36 : f32 to vector<1x1xf32>
      %82 = arith.addf %78, %81 : vector<1x1xf32>
      %83 = arith.divf %72, %82 : vector<1x1xf32>
      %cst_37 = arith.constant 9.99999997E-7 : f32
      %84 = vector.broadcast %cst_37 : f32 to vector<1x1xf32>
      %85 = arith.addf %80, %84 : vector<1x1xf32>
      %86 = arith.divf %73, %85 : vector<1x1xf32>
      %cst_38 = arith.constant 1.000000e+00 : f32
      %87 = vector.broadcast %cst_38 : f32 to vector<1x1xf32>
      %88 = arith.addf %87, %74 : vector<1x1xf32>
      %89 = math.log %88 : vector<1x1xf32>
      %cst_39 = arith.constant 5.000000e-01 : f32
      %90 = vector.broadcast %cst_39 : f32 to vector<1x1xf32>
      %91 = arith.mulf %90, %89 : vector<1x1xf32>
      %cst_40 = arith.constant 1.000000e+00 : f32
      %92 = vector.broadcast %cst_40 : f32 to vector<1x1xf32>
      %93 = arith.addf %92, %75 : vector<1x1xf32>
      %94 = math.log %93 : vector<1x1xf32>
      %cst_41 = arith.constant 2.000000e-02 : f32
      %95 = vector.broadcast %cst_41 : f32 to vector<1x1xf32>
      %96 = arith.mulf %95, %94 : vector<1x1xf32>
      %cst_42 = arith.constant 2.000000e+00 : f32
      %97 = vector.broadcast %cst_42 : f32 to vector<1x1xf32>
      %98 = arith.subf %97, %83 : vector<1x1xf32>
      %cst_43 = arith.constant 3.000000e-01 : f32
      %99 = vector.broadcast %cst_43 : f32 to vector<1x1xf32>
      %100 = arith.mulf %99, %86 : vector<1x1xf32>
      %101 = arith.addf %98, %100 : vector<1x1xf32>
      %102 = arith.addf %91, %96 : vector<1x1xf32>
      %103 = arith.addf %102, %101 : vector<1x1xf32>
      %104 = tpu.iota {dimensions = array<i32: 0>} : vector<3x128xi32>
      %c0_i32_44 = arith.constant 0 : i32
      %105 = vector.broadcast %c0_i32_44 : i32 to vector<3x128xi32>
      %106 = arith.cmpi eq, %104, %105 : vector<3x128xi32>
      %c1_i32 = arith.constant 1 : i32
      %107 = vector.broadcast %c1_i32 : i32 to vector<3x128xi32>
      %108 = arith.cmpi eq, %104, %107 : vector<3x128xi32>
      %109 = vector.shape_cast %83 : vector<1x1xf32> to vector<1x1xf32>
      %110 = vector.broadcast %109 : vector<1x1xf32> to vector<3x128xf32>
      %111 = vector.shape_cast %86 : vector<1x1xf32> to vector<1x1xf32>
      %112 = vector.broadcast %111 : vector<1x1xf32> to vector<3x128xf32>
      %113 = arith.select %108, %110, %112 : vector<3x128xi1>, vector<3x128xf32>
      %114 = vector.shape_cast %103 : vector<1x1xf32> to vector<1x1xf32>
      %115 = vector.broadcast %114 : vector<1x1xf32> to vector<3x128xf32>
      %116 = arith.select %106, %115, %113 : vector<3x128xi1>, vector<3x128xf32>
      %c0_45 = arith.constant 0 : index
      %c0_46 = arith.constant 0 : index
      %117 = vector.load %arg4[%c0_45, %c0_46] : memref<3x128xf32, #tpu.memory_space<vmem>>, vector<3x128xf32>
      tpu.vector_store %arg4[%c0_45, %c0_46], %116 {strides = array<i32>} : memref<3x128xf32, #tpu.memory_space<vmem>>, vector<3x128xf32>,
    } else {
    }
    return
  }
  func.func @transform_0(%arg0: i32) -> (i32, i32) {
    %c0_i32 = arith.constant 0 : i32
    %c0_i32_0 = arith.constant 0 : i32
    return %c0_i32, %arg0 : i32, i32
  }
  func.func @transform_1(%arg0: i32) -> (i32, i32) {
    %c0_i32 = arith.constant 0 : i32
    %c0_i32_0 = arith.constant 0 : i32
    %c0_i32_1 = arith.constant 0 : i32
    return %c0_i32, %c0_i32_0 : i32, i32
  }
  func.func @transform_2(%arg0: i32) -> (i32, i32) {
    %c0_i32 = arith.constant 0 : i32
    %c0_i32_0 = arith.constant 0 : i32
    %c0_i32_1 = arith.constant 0 : i32
    return %c0_i32, %c0_i32_0 : i32, i32
  }
  func.func @transform_3(%arg0: i32) -> (i32, i32) {
    %c0_i32 = arith.constant 0 : i32
    %c0_i32_0 = arith.constant 0 : i32
    %c0_i32_1 = arith.constant 0 : i32
    return %c0_i32, %c0_i32_0 : i32, i32
  }
}

</mosaic_0001>

<llo_original>
// kernel: tpu_custom_call.1
$region0: #{tpu_custom_call.1}
  #allocation0 [shape = 'u32[]', space=smem, size = 0x4, offset = 0x4, fixed_abs, tag = 'smem constant byte address 0x4 - core index']
  #allocation1 [shape = 'u32[72,128]{1,0:T(1,128)}', space=vmem, size = 0x9000, scoped, tag = 'internal scratch']
  #allocation2 [shape = 'f32[8,8]{1,0:T(8,128)}', space=vmem, size = 0x1000, scoped, tag = 'scratch operand']
  %s0 = inlined_call_operand.vmem [shape: f32[8,32], index: 0, kind: input, shape index: {}]
  %s1 = inlined_call_operand.vmem [shape: s32[8,1], index: 1, kind: input, shape index: {}]
  %s2 = inlined_call_operand.vmem [shape: s32[1,8], index: 2, kind: input, shape index: {}]
  %s3 = inlined_call_operand.hbm [shape: f32[3,128], index: 3, kind: output, shape index: {}]
  %s4 = sld [smem:[#allocation0]]
  $region30: #{tpu_custom_call.1} parent=0
    _
  %s6 = ssub.s32 1, %s4
  %s7 = scalar_select 0, %s6, %s4
  $region1: #{tpu_custom_call.1} parent=0
    #allocation3 [shape = 'u8[2048]{0}', space=vmem, size = 0x800, scoped, tag = 'output window, operand 0, single buffered']
    #allocation4 [shape = 's32[1]{0}', space=sflag, size = 0x4, scoped, tag = 'scoped memory for tpu_custom_call.1']
    %8 = vsyncpa [#allocation4], 0
    // Predicated region
    $region2: #{tpu_custom_call.1} parent=1 // pred_check
      _
    $region3: #{tpu_custom_call.1} parent=1 // pred_check_branch
      %10 = sbr.rel (0) target = $region5
    $region4: #{tpu_custom_call.1} parent=1 // pred_region
      _
    $region5: #{tpu_custom_call.1} parent=1 // pred_fallthru
      _
    // Predicated region
    $region6: #{tpu_custom_call.1} parent=1 // pred_check
      _
    $region7: #{tpu_custom_call.1} parent=1 // pred_check_branch
      %12 = sbr.rel (0) target = $region9
    $region8: #{tpu_custom_call.1} parent=1 // pred_region
      _
    $region9: #{tpu_custom_call.1} parent=1 // pred_fallthru
      _
    // Predicated region
    $region10: #{tpu_custom_call.1} parent=1 // pred_check
      _
    $region11: #{tpu_custom_call.1} parent=1 // pred_check_branch
      %14 = sbr.rel (0) target = $region13
    $region12: #{tpu_custom_call.1} parent=1 // pred_region
      _
    $region13: #{tpu_custom_call.1} parent=1 // pred_fallthru
      _
    %p15 = scmp.eq.s32.totalorder 0, 0
    // Predicated region
    $region14: #{tpu_custom_call.1} parent=1 // pred_check
      %p16 = pneg %p15
    $region15: #{tpu_custom_call.1} parent=1 // pred_check_branch
      %18 = sbr.rel (%p16) target = $region17
    $region16: #{tpu_custom_call.1} parent=1 // pred_region
      %vm19 = vcmask 64512
      %20 = vst.msk [vmem:[#allocation2] sm:$0xff] %vm19, 0.0
    $region17: #{tpu_custom_call.1} parent=1 // pred_fallthru
      _
    %v21 = vld [vmem:[%s0] sm:$0xff]
    %v22 = vld [vmem:[#allocation2] sm:$0xff]
    %vm23 = vcmask 261120
    %v25 = vsel %vm23, %v21, 0
    %27 = vmatpush.xpose.msra.mxu0 0.0
    %28 = vmatpush.xpose.msra.mxu0 0.0
    %29 = vmatpush.xpose.msra.mxu0 0.0
    %30 = vmatpush.xpose.msra.mxu0 0.0
    %31 = vmatpush.xpose.msra.mxu0 0.0
    %32 = vmatpush.xpose.msra.mxu0 0.0
    %33 = vmatpush.xpose.msra.mxu0 0.0
    %34 = vmatpush.xpose.msra.mxu0 0.0
    %35 = vmatpush.xpose.msra.mxu0 0.0
    %36 = vmatpush.xpose.msra.mxu0 0.0
    %37 = vmatpush.xpose.msra.mxu0 0.0
    %38 = vmatpush.xpose.msra.mxu0 0.0
    %39 = vmatpush.xpose.msra.mxu0 0.0
    %40 = vmatpush.xpose.msra.mxu0 0.0
    %41 = vmatpush.xpose.msra.mxu0 0.0
    %42 = vmatpush.xpose.msra.mxu0 %v25
    %43 = vmatmul.f32.gmra.mxu0 %v25
    %v44 = vpop.f32.mrf.mxu0
    %v45 = vadd.f32 0.0, %v44
    %46 = vdwg.mxu0
    %v47 = vadd.f32 %v22, %v45
    %vm48 = vcmask 64512
    %49 = vst.msk [vmem:[#allocation2] sm:$0xff] %vm48, %v47
    // Predicated region
    $region18: #{tpu_custom_call.1} parent=1 // pred_check
      %p50 = pneg %p15
    $region19: #{tpu_custom_call.1} parent=1 // pred_check_branch
      %52 = sbr.rel (%p50) target = $region21
    $region20: #{tpu_custom_call.1} parent=1 // pred_region
      %v53 = vld [vmem:[#allocation2] sm:$0xff]
      %v54 = vld [vmem:[%s1] sm:$0xff]
      %v55 = vld [vmem:[%s2] sm:$0x1]
      %56 = vset.pattern.permute.xlu0 0
      %57 = vperm.xlu0 %56, %v54
      %v58 = vpop.permute.xlu0 %57
      %v59 = vperm.slane %v55, 0
      %vm60 = vcmp.eq.s32.totalorder %v58, %v59
      %v61 = vlaneseq
      %v62 = vshrl.u32 %v61, 7
      %v63 = vlaneseq
      %v64 = vand.u32 %v63, 127
      %vm65 = vcmp.eq.s32.totalorder %v62, %v64
      %vm66 = vmxor %vm65, 1
      %vm67 = vmand %vm60, %vm66
      %v68 = vsel %vm65, %v53, 0.0
      %v69 = vsel %vm48, %v68, 0.0
      %70 = vadd.xlane.f32.xlu0 %v69
      %v71 = vpop.xlane.xlu0 %70
      %v72 = vmax.f32 %v71, 1e-24
      %v73 = vrsqrt.pop %v72
      %v74 = vmul.f32 %v73, %v72
      %v75 = vmul.f32 %v74, %v73
      %v76 = vmul.f32 0.5, %v75
      %v77 = vsub.f32 1.5, %v76
      %v78 = vmul.f32 %v73, %v77
      %vm79 = vweird.f32 %v72
      %vm80 = vweird.f32 %v73
      %vm81 = vmor %vm79, %vm80
      %v82 = vsel %vm81, %v73, %v78
      %v83 = vrot.slane %v69, 4
      %v84 = vadd.f32 %v69, %v83
      %v85 = vrot.slane %v84, 2
      %v86 = vadd.f32 %v84, %v85
      %v87 = vrot.slane %v86, 1
      %v88 = vadd.f32 %v86, %v87
      %v89 = vmax.f32 %v88, 1e-24
      %v90 = vrsqrt.pop %v89
      %v91 = vmul.f32 %v90, %v89
      %v92 = vmul.f32 %v91, %v90
      %v93 = vmul.f32 0.5, %v92
      %v94 = vsub.f32 1.5, %v93
      %v95 = vmul.f32 %v90, %v94
      %vm96 = vweird.f32 %v89
      %vm97 = vweird.f32 %v90
      %vm98 = vmor %vm96, %vm97
      %v99 = vsel %vm98, %v90, %v95
      %v100 = vmul.f32 %v53, %v82
      %v101 = vmul.f32 %v100, %v99
      %v102 = vsel %vm67, %v101, 0.0
      %v103 = vsel %vm48, %v102, 0.0
      %v104 = vrot.slane %v103, 4
      %v105 = vadd.f32 %v103, %v104
      %v106 = vrot.slane %v105, 2
      %v107 = vadd.f32 %v105, %v106
      %v108 = vrot.slane %v107, 1
      %v109 = vadd.f32 %v107, %v108
      %v110 = vand.u32 2147483647, %v101
      %v111 = vsel %vm60, 0.0, %v110
      %v112 = vsel %vm48, %v111, 0.0
      %v113 = vrot.slane %v112, 4
      %v114 = vadd.f32 %v112, %v113
      %v115 = vrot.slane %v114, 2
      %v116 = vadd.f32 %v114, %v115
      %v117 = vrot.slane %v116, 1
      %v118 = vadd.f32 %v116, %v117
      %v119 = vsub.f32 %v101, 0.8
      %v120 = vmul.f32 %v119, -2.0
      %v121 = vsel %vm67, %v120, -1e+09
      %v122 = vmul.f32 %v121, 1.442695
      %v123 = vpow.pop %v122
      %v124 = vsel %vm48, %v123, 0.0
      %v125 = vrot.slane %v124, 4
      %v126 = vadd.f32 %v124, %v125
      %v127 = vrot.slane %v126, 2
      %v128 = vadd.f32 %v126, %v127
      %v129 = vrot.slane %v128, 1
      %v130 = vadd.f32 %v128, %v129
      %v131 = vmul.f32 %v119, 50.0
      %v132 = vsel %vm60, -1e+09, %v131
      %v133 = vmul.f32 %v132, 1.442695
      %v134 = vpow.pop %v133
      %v135 = vsel %vm48, %v134, 0.0
      %v136 = vrot.slane %v135, 4
      %v137 = vadd.f32 %v135, %v136
      %v138 = vrot.slane %v137, 2
      %v139 = vadd.f32 %v137, %v138
      %v140 = vrot.slane %v139, 1
      %v141 = vadd.f32 %v139, %v140
      %v142 = vsel %vm60, 1, 0
      %v143 = vcvt.s32.f32 %v142
      %v144 = vsel %vm48, %v143, 0.0
      %v145 = vrot.slane %v144, 4
      %v146 = vadd.f32 %v144, %v145
      %v147 = vrot.slane %v146, 2
      %v148 = vadd.f32 %v146, %v147
      %v149 = vrot.slane %v148, 1
      %v150 = vadd.f32 %v148, %v149
      %vm151 = vcmask 1040384
      %v152 = vsel %vm151, %v109, %v118
      %vm153 = vcmask 1041408
      %v154 = vsel %vm153, %v152, %v130
      %vm155 = vcmask 1042432
      %v156 = vsel %vm155, %v154, %v141
      %vm157 = vcmask 1043456
      %v158 = vsel %vm157, %v156, %v150
      %vm159 = vcmask 61440
      %v160 = vsel %vm159, %v158, 0.0
      %161 = vadd.xlane.f32.xlu0 %v160
      %v162 = vpop.xlane.xlu0 %161
      %v163 = vsub.f32 %v162, 8.0
      %v164 = vsub.f32 64.0, %v162
      %v165 = vadd.f32 %v163, 1e-06
      %v167 = vrot.slane %v165, 4
      %v169 = vrcp.pop %v167
      %v170 = vmul.f32 %v167, %v169
      %v171 = vsub.f32 1.0, %v170
      %v172 = vmul.f32 %v169, %v171
      %v173 = vadd.f32 %v169, %v172
      %vm174 = vweird.f32 %v167
      %vm175 = vweird.f32 %v169
      %vm176 = vmor %vm174, %vm175
      %v177 = vsel %vm176, %v169, %v173
      %v178 = vand.u32 2147483647, %v167
      %vm179 = vcmp.eq.f32.partialorder %v178, 8.507059e+37
      %v180 = vand.u32 %v167, 2147483648
      %v181 = vor.u32 1.1754944e-38, %v180
      %v182 = vsel %vm179, %v181, %v177
      %v183 = vmul.f32 %v162, %v182
      %v184 = vadd.f32 %v164, 1e-06
      %v186 = vrot.slane %v184, 3
      %v188 = vrcp.pop %v186
      %v189 = vmul.f32 %v186, %v188
      %v190 = vsub.f32 1.0, %v189
      %v191 = vmul.f32 %v188, %v190
      %v192 = vadd.f32 %v188, %v191
      %vm193 = vweird.f32 %v186
      %vm194 = vweird.f32 %v188
      %vm195 = vmor %vm193, %vm194
      %v196 = vsel %vm195, %v188, %v192
      %v197 = vand.u32 2147483647, %v186
      %vm198 = vcmp.eq.f32.partialorder %v197, 8.507059e+37
      %v199 = vand.u32 %v186, 2147483648
      %v200 = vor.u32 1.1754944e-38, %v199
      %v201 = vsel %vm198, %v200, %v196
      %v202 = vmul.f32 %v162, %v201
      %v203 = vadd.f32 %v162, 1.0
      %v204 = vlog2.pop %v203
      %v205 = vmul.f32 %v204, 0.6931472
      %v206 = vmul.f32 %v205, 0.5
      %v207 = vmul.f32 %v205, 0.02
      %v208 = vsub.f32 2.0, %v183
      %v209 = vmul.f32 %v202, 0.3
      %v211 = vrot.slane %v209, 1
      %v213 = vadd.f32 %v208, %v211
      %v215 = vrot.slane %v207, 1
      %v217 = vadd.f32 %v206, %v215
      %v219 = vrot.slane %v213, 6
      %v221 = vadd.f32 %v217, %v219
      %vm222 = vcmp.eq.s32.totalorder %v62, 0
      %vm223 = vcmp.eq.s32.totalorder %v62, 1
      %s225 = vtos %v183
      %v226 = vstv %s225
      %v229 = vrot.slane %v202, 1
      %s230 = vtos %v229
      %v231 = vstv %s230
      %v233 = vsel %vm223, %v226, %v231
      %v235 = vrot.slane %v221, 2
      %s236 = vtos %v235
      %v237 = vstv %s236
      %v239 = vsel %vm222, %v237, %v233
      %240 = vst [vmem:[#allocation3] sm:$0x7] %v239
    $region21: #{tpu_custom_call.1} parent=1 // pred_fallthru
      _
    // Predicated region
    $region22: #{tpu_custom_call.1} parent=1 // pred_check
      _
    $region23: #{tpu_custom_call.1} parent=1 // pred_check_branch
      %242 = sbr.rel (0) target = $region25
    $region24: #{tpu_custom_call.1} parent=1 // pred_region
      %244 = vsyncadd [#allocation4], 0
      %s246 = sshll.u32 [#allocation3], 4
      %s247 = int_to_ptr.vmem [resolvable:$true] %s246
      %s248 = sshll.u32 %s3, 4
      %s249 = int_to_ptr.hbm [resolvable:$true] %s248
      %251 = dma.vmem_to_hbm [thread:$0]  %s247, 64, %s249, [#allocation4]
    $region25: #{tpu_custom_call.1} parent=1 // pred_fallthru
      _
    // Predicated region
    $region26: #{tpu_custom_call.1} parent=1 // pred_check
      _
    $region27: #{tpu_custom_call.1} parent=1 // pred_check_branch
      %253 = sbr.rel (0) target = $region29
    $region28: #{tpu_custom_call.1} parent=1 // pred_region
      %255 = dma.done [#allocation4], 64
    $region29: #{tpu_custom_call.1} parent=1 // pred_fallthru
      _
    %256 = vsyncpa [#allocation4], 1

</llo_original>
